<compile_context>
chip_gen: v7x
topology: tpu7x:2x2x1
jax: 0.10.0
libtpu: 0.0.40
codegen_flags: <defaults>
</compile_context>

<pallas_src>
import math
import functools

import jax
import jax.numpy as jnp
from jax.experimental import pallas as pl
from jax.experimental.pallas import tpu as pltpu


def _round_up(x, m):
    return -(-x // m) * m


def _cdiv(a, b):
    return -(-a // b)


def _choose_tile_hw(HW, A, T, budget_bytes=2 << 20):
    """Lane tile over the per-`a` spatial (H*W) axis.

    Multiple of 128, VMEM-budgeted (input block + output block, double
    buffered -> ~4x budget live, fits default scoped VMEM on v5e/v6e/v7x),
    bounded padding waste, and keeps >= 8 total grid steps when possible so
    the 2-TensorCore v7x megacore stays balanced."""
    hw128 = _round_up(HW, 128)
    max_tile = max(128, min((budget_bytes // (T * 4)) // 128 * 128, hw128))
    tile = 128
    for cand in (256, 512, 1024, 2048, 4096, 8192):
        if cand > max_tile:
            break
        n_tiles = _cdiv(HW, cand)
        waste = n_tiles * cand - HW
        if waste > max(127, HW // 16):
            continue  # > ~6% padded lanes: not worth the larger tile
        if A * n_tiles < 8 and A * _cdiv(HW, tile) >= 8:
            continue  # keep >= 8 grid steps for megacore sharding
        tile = cand
    return tile


def _pos_enc_kernel(pe_hw_ref, o_ref, *, token_dim, half, n_dims, log_temp):
    """Writes one (T, tile_hw) tile: (pe_a(t, a) + pe_hw[t, :]) / n_dims.

    `a` is grid axis 1; pe_hw already contains pe_h + pe_w for the lanes of
    this tile.  Only T sin/cos are evaluated per block (the pe_a column)."""
    T = token_dim
    a_f = pl.program_id(1).astype(jnp.float32)

    # Token-dependent frequency / phase on a (T, 1) column (sublane axis):
    #   rows [0, half)   -> sin(p * temperature^(-2j/T)), j = t
    #   rows [half, T)   -> cos(p * temperature^(-2j/T)), j = t - half
    t = jax.lax.broadcasted_iota(jnp.int32, (T, 1), 0)
    is_sin = t < half
    j = jnp.where(is_sin, t, t - half).astype(jnp.float32)
    inv_freq = jnp.exp(j * jnp.float32(-2.0 * log_temp / T))       # (T, 1)
    ang = a_f * inv_freq
    pe_a = jnp.where(is_sin, jnp.sin(ang), jnp.cos(ang))           # (T, 1)

    # TODO(synk): cast to bfloat16 here if the consumer tolerates it (v5e
    # write-bandwidth win); kept float32 to match the torch module.
    o_ref[...] = (pe_a + pe_hw_ref[...]) * jnp.float32(1.0 / n_dims)


def _axis_table(L, T, temperature):
    """(T, L) 1-D encoding table, mirroring the torch code exactly:
    rows [0, ceil(T/2)) = sin terms, rows [ceil(T/2), T) = cos terms."""
    grid_dim = jnp.arange(T, dtype=jnp.float32)
    grid_dim = 2.0 * jnp.floor(grid_dim / 2.0) / T
    grid_dim = jnp.float32(temperature) ** grid_dim                 # (T,)
    pos = jnp.arange(L, dtype=jnp.float32)[:, None] / grid_dim      # (L, T)
    tab = jnp.concatenate([jnp.sin(pos[:, 0::2]), jnp.cos(pos[:, 1::2])], axis=1)
    return tab.T                                                    # (T, L)


@functools.lru_cache(maxsize=64)
def _position_encoding_impl(A, H, W, token_dim, temperature, n_dims):
    """Builds the (1, T, A, H, W) encoding for a given shape (memoized:
    the result is independent of x's values, so the kernel runs once per
    distinct shape -- review opt #9)."""
    T = token_dim
    half = (T + 1) // 2
    HW = H * W

    tile_hw = _choose_tile_hw(HW, A, T)
    n_hw_tiles = _cdiv(HW, tile_hw)
    HW_pad = n_hw_tiles * tile_hw

    # Tiny separable table: pe_hw[t, h*W + w] = pe_h[t, h] + pe_w[t, w].
    # O(T*(H+W)) transcendentals total; kilobyte-scale, built with plain XLA.
    pe_h = _axis_table(H, T, temperature)                           # (T, H)
    pe_w = _axis_table(W, T, temperature)                           # (T, W)
    pe_hw = (pe_h[:, :, None] + pe_w[:, None, :]).reshape(T, HW)
    if HW_pad != HW:
        pe_hw = jnp.pad(pe_hw, ((0, 0), (0, HW_pad - HW)))

    kernel = functools.partial(
        _pos_enc_kernel, token_dim=T, half=half, n_dims=n_dims,
        log_temp=math.log(float(temperature)))

    flat = pl.pallas_call(
        kernel,
        out_shape=jax.ShapeDtypeStruct((T, A * HW_pad), jnp.float32),
        grid_spec=pltpu.PrefetchScalarGridSpec(
            num_scalar_prefetch=0,
            # a innermost: the pe_hw input block index is constant across the
            # inner loop, so it is only (re)fetched n_hw_tiles times total.
            grid=(n_hw_tiles, A),
            in_specs=[pl.BlockSpec((T, tile_hw), lambda ihw, ia: (0, ihw))],
            out_specs=pl.BlockSpec(
                (T, tile_hw), lambda ihw, ia: (0, ia * n_hw_tiles + ihw)),
        ),
        compiler_params=pltpu.CompilerParams(
            dimension_semantics=("parallel", "parallel")),
        cost_estimate=pl.CostEstimate(
            flops=int(2 * T * A * HW_pad),
            transcendentals=int(2 * T * A * n_hw_tiles),
            bytes_accessed=int(4 * T * HW_pad * (A + 1)),
        ),
    )(pe_hw)

    pos = flat.reshape(T, A, HW_pad)                    # free row-major view
    if HW_pad != HW:
        # TODO(synk): this slice is one extra HBM pass over the output for
        # non-128-multiple volumes; consumers that accept a lane-padded layout
        # should take `flat` directly instead.
        pos = pos[:, :, :HW]
    return pos.reshape(T, A, H, W)[None, ...]           # (1, T, A, H, W)


def position_encoding(x, dim, token_dim, temperature):
    """JAX/Pallas equivalent of PositionEncoding.forward.

    x: (B, 1, A, H, W) -- only its shape is used.
    dim: must be [2, 3, 4] (the volumetric case implied by the rearrange).
    Returns (1, token_dim, A, H, W) float32."""
    assert x.ndim == 5, "the object of position encoding requires 5-dim tensor!"
    assert list(dim) == [2, 3, 4], "this kernel implements the volumetric case dim=[2,3,4]"
    # TODO(synk): generalize to arbitrary `dim` subsets (incl. the batch axis).
    _, _, A, H, W = x.shape
    return _position_encoding_impl(int(A), int(H), int(W), int(token_dim),
                                   float(temperature), len(dim))


def _reference(x, dim, token_dim, temperature):
    """Pure-JAX reference mirroring the PyTorch code."""
    T = token_dim
    grid_dim = jnp.arange(T, dtype=jnp.float32)
    grid_dim = 2.0 * jnp.floor(grid_dim / 2.0) / T
    grid_dim = jnp.float32(temperature) ** grid_dim
    position = None
    for d in dim:
        L = x.shape[d]
        pos_size = [1, 1, 1, 1, 1, T]
        pos_size[d] = L
        pos_dim = jnp.arange(L, dtype=jnp.float32)[:, None] / grid_dim
        pos_dim = jnp.concatenate(
            [jnp.sin(pos_dim[:, 0::2]), jnp.cos(pos_dim[:, 1::2])], axis=1)
        pos_dim = pos_dim.reshape(pos_size)
        position = pos_dim if position is None else position + pos_dim
    # 'b 1 a h w dim -> b dim a h w'
    position = jnp.squeeze(position, axis=1)              # (b, a, h, w, dim)
    position = jnp.transpose(position, (0, 4, 1, 2, 3))   # (b, dim, a, h, w)
    return position / len(dim)


if __name__ == "__main__":
    key = jax.random.PRNGKey(0)
    token_dim = 32
    temperature = 10000.0
    dim = [2, 3, 4]

    # Case 1: small volume, single hw-tile, 4 grid steps (padded lanes sliced).
    B, C, A, H, W = 2, 1, 4, 8, 8
    x = jax.random.normal(key, (B, C, A, H, W), dtype=jnp.float32)
    out = jax.block_until_ready(position_encoding(x, dim, token_dim, temperature))
    ref = jax.block_until_ready(_reference(x, dim, token_dim, temperature))
    assert out.shape == (1, token_dim, A, H, W), out.shape
    assert jnp.allclose(out, ref, rtol=1e-4, atol=1e-4), float(
        jnp.max(jnp.abs(out - ref)))

    # Case 2: non-multiple-of-128 spatial extents (padding + slice path).
    B2, C2, A2, H2, W2 = 1, 1, 3, 5, 7
    x2 = jax.random.normal(key, (B2, C2, A2, H2, W2), dtype=jnp.float32)
    out2 = jax.block_until_ready(position_encoding(x2, dim, token_dim, temperature))
    ref2 = jax.block_until_ready(_reference(x2, dim, token_dim, temperature))
    assert out2.shape == (1, token_dim, A2, H2, W2), out2.shape
    assert jnp.allclose(out2, ref2, rtol=1e-4, atol=1e-4), float(
        jnp.max(jnp.abs(out2 - ref2)))

    # Case 3: lane-aligned HW (256), >= 8 grid steps, no padding / no slice.
    B3, C3, A3, H3, W3 = 1, 1, 8, 16, 16
    x3 = jax.random.normal(key, (B3, C3, A3, H3, W3), dtype=jnp.float32)
    out3 = jax.block_until_ready(position_encoding(x3, dim, token_dim, temperature))
    ref3 = jax.block_until_ready(_reference(x3, dim, token_dim, temperature))
    assert out3.shape == (1, token_dim, A3, H3, W3), out3.shape
    assert jnp.allclose(out3, ref3, rtol=1e-4, atol=1e-4), float(
        jnp.max(jnp.abs(out3 - ref3)))

    print("KERNEL_OK")
</pallas_src>

<mosaic_0001>
module attributes {stable_mosaic.version = 11 : i64} {
  func.func @_pos_enc_kernel(%arg0: i32, %arg1: i32, %arg2: memref<32x128xf32, #tpu.memory_space<vmem>>, %arg3: memref<32x128xf32, #tpu.memory_space<vmem>>) attributes {dimension_semantics = [#tpu.dimension_semantics<parallel>, #tpu.dimension_semantics<parallel>], iteration_bounds = array<i64: 1, 4>, scalar_prefetch = 0 : i64, scratch_operands = 0 : i64, tpu.core_type = #tpu.core_type<tc>, window_params = [{transform_indices = @transform_0, window_bounds = array<i64: 32, 128>}, {transform_indices = @transform_1, window_bounds = array<i64: 32, 128>}]} {
    %0 = arith.sitofp %arg1 : i32 to f32
    %1 = tpu.iota {dimensions = array<i32: 0>} : vector<32x1xi32>
    %c16_i32 = arith.constant 16 : i32
    %2 = vector.broadcast %c16_i32 : i32 to vector<32x1xi32>
    %3 = arith.cmpi slt, %1, %2 : vector<32x1xi32>
    %c16_i32_0 = arith.constant 16 : i32
    %4 = vector.broadcast %c16_i32_0 : i32 to vector<32x1xi32>
    %5 = arith.subi %1, %4 : vector<32x1xi32>
    %6 = arith.select %3, %1, %5 : vector<32x1xi1>, vector<32x1xi32>
    %7 = arith.sitofp %6 : vector<32x1xi32> to vector<32x1xf32>
    %cst = arith.constant -0.575646281 : f32
    %8 = vector.broadcast %cst : f32 to vector<32x1xf32>
    %9 = arith.mulf %7, %8 : vector<32x1xf32>
    %10 = math.exp %9 : vector<32x1xf32>
    %11 = vector.broadcast %0 : f32 to vector<32x1xf32>
    %12 = arith.mulf %11, %10 : vector<32x1xf32>
    %13 = math.sin %12 : vector<32x1xf32>
    %14 = math.cos %12 : vector<32x1xf32>
    %15 = arith.select %3, %13, %14 : vector<32x1xi1>, vector<32x1xf32>
    %c0 = arith.constant 0 : index
    %c0_1 = arith.constant 0 : index
    %16 = vector.load %arg2[%c0, %c0_1] : memref<32x128xf32, #tpu.memory_space<vmem>>, vector<32x128xf32>
    %17 = vector.broadcast %15 : vector<32x1xf32> to vector<32x128xf32>
    %18 = arith.addf %17, %16 : vector<32x128xf32>
    %cst_2 = arith.constant 0.333333343 : f32
    %19 = vector.broadcast %cst_2 : f32 to vector<32x128xf32>
    %20 = arith.mulf %18, %19 : vector<32x128xf32>
    %c0_3 = arith.constant 0 : index
    %c0_4 = arith.constant 0 : index
    %21 = vector.load %arg3[%c0_3, %c0_4] : memref<32x128xf32, #tpu.memory_space<vmem>>, vector<32x128xf32>
    tpu.vector_store %arg3[%c0_3, %c0_4], %20 {strides = array<i32>} : memref<32x128xf32, #tpu.memory_space<vmem>>, vector<32x128xf32>,
    return
  }
  func.func @transform_0(%arg0: i32, %arg1: i32) -> (i32, i32) {
    %c0_i32 = arith.constant 0 : i32
    %c0_i32_0 = arith.constant 0 : i32
    return %c0_i32, %arg0 : i32, i32
  }
  func.func @transform_1(%arg0: i32, %arg1: i32) -> (i32, i32) {
    %c1_i32 = arith.constant 1 : i32
    %0 = arith.muli %arg1, %c1_i32 : i32
    %1 = arith.addi %0, %arg0 : i32
    %c0_i32 = arith.constant 0 : i32
    %c0_i32_0 = arith.constant 0 : i32
    return %c0_i32, %1 : i32, i32
  }
}

</mosaic_0001>

<llo_original>
// kernel: tpu_custom_call.1
$region0: #{tpu_custom_call.1}
  #allocation0 [shape = 'u32[]', space=smem, size = 0x4, offset = 0x4, fixed_abs, tag = 'smem constant byte address 0x4 - core index']
  #allocation1 [shape = 'u32[144,128]{1,0:T(1,128)}', space=vmem, size = 0x12000, scoped, tag = 'internal scratch']
  %s0 = inlined_call_operand.hbm [shape: f32[32,128], index: 0, kind: input, shape index: {}]
  %s1 = inlined_call_operand.hbm [shape: f32[32,512], index: 1, kind: output, shape index: {}]
  %s2 = sld [smem:[#allocation0]]
  $region41: #{tpu_custom_call.1} parent=0
    _
  %s4 = ssub.s32 1, %s2
  %s5 = scalar_select 0, %s4, %s2
  $region1: #{tpu_custom_call.1} parent=0
    #allocation2 [shape = 'u8[16384]{0}', space=vmem, size = 0x4000, scoped, tag = 'input window, operand 0, single buffered']
    #allocation3 [shape = 's32[2]{0}', space=sflag, size = 0x8, scoped, tag = 'scoped memory for tpu_custom_call.1']
    #allocation4 [shape = 's32[2]{0}', space=sflag, size = 0x8, scoped, tag = 'scoped memory for tpu_custom_call.1']
    #allocation5 [shape = 'u8[32768]{0}', space=vmem, size = 0x8000, scoped, tag = 'output window, operand 0']
    %6 = vsyncpa [#allocation3], 0
    %7 = vsyncpa [#allocation4], 0
    %s8 = scalar_lea.sflag [#allocation4], 1
    %9 = vsyncpa %s8, 0
    loop: start=0, step=1, limit=6
    $region2: #{tpu_custom_call.1} parent=1 // loop_pre_header
      _
    $region3: #{tpu_custom_call.1} parent=1 // loop_header
      %s11 = sphi 0, %s15
      %p12 = scmp.ge.s32.totalorder %s11, 6
      %s18 = sphi 0, %s30
      %s19 = sphi 0, %s26
      %s20 = sphi 0, %s18
      %s21 = sphi 0, %s19
      %s22 = sphi 0, %s20
      %s23 = sphi 0, %s21
      %s33 = sphi 0, %s35
      %s36 = sphi 0, %s33
      %s37 = sphi 0, %s36
      %s53 = sphi 0, %s37
      %s61 = sphi 0, %s63
      %s64 = sphi 0, %s61
      %s65 = sphi 0, %s64
      %s81 = sphi 0, %s65
    $region4: #{tpu_custom_call.1} parent=1 // loop_header_branch
      %14 = sbr.rel (%p12) target = $region8
    $region5: #{tpu_custom_call.1} parent=1 // loop_body
      %s16 = ssub.s32 %s11, 1
      %s17 = ssub.s32 %s11, 2
      %s24 = sadd.s32 1, %s19
      %p25 = scmp.ge.s32.totalorder %s24, 4
      %s26 = scalar_select %p25, 0, %s24
      %s27 = sadd.s32 1, %s18
      %s28 = scalar_select %p25, %s27, %s18
      %p29 = scmp.ge.s32.totalorder %s28, 1
      %s30 = scalar_select %p29, 0, %s28
      %s31 = ssub.s32 %s18, %s30
      %p32 = scmp.eq.s32.totalorder %s31, 0
      %s34 = sadd.s32 %s33, 1
      %s35 = scalar_select %p32, %s33, %s34
      %p38 = pneg %p32
      %p39 = scmp.eq.s32.totalorder %s11, 3
      %p40 = por %p38, %p39
      %p41 = scmp.ne.s32.totalorder %s33, %s36
      %p42 = scmp.eq.s32.totalorder %s11, 0
      %p43 = por %p41, %p42
      %p44 = scmp.ne.s32.totalorder %s33, %s36
      %p45 = scmp.eq.s32.totalorder %s16, 3
      %p46 = por %p44, %p45
      %p47 = scmp.ne.s32.totalorder %s36, %s37
      %p48 = scmp.eq.s32.totalorder %s16, 0
      %p49 = por %p47, %p48
      %p50 = scmp.ne.s32.totalorder %s36, %s37
      %p51 = scmp.eq.s32.totalorder %s17, 3
      %p52 = por %p50, %p51
      %p54 = scmp.ne.s32.totalorder %s37, %s53
      %p55 = scmp.eq.s32.totalorder %s17, 0
      %p56 = por %p54, %p55
      %s57 = sadd.s32 %s19, %s18
      %s58 = sadd.s32 %s26, %s30
      %s59 = ssub.s32 %s57, %s58
      %p60 = scmp.eq.s32.totalorder %s59, 0
      %s62 = sadd.s32 %s61, 1
      %s63 = scalar_select %p60, %s61, %s62
      %p66 = pneg %p60
      %p67 = scmp.eq.s32.totalorder %s11, 3
      %p68 = por %p66, %p67
      %p69 = scmp.ne.s32.totalorder %s61, %s64
      %p70 = scmp.eq.s32.totalorder %s11, 0
      %p71 = por %p69, %p70
      %p72 = scmp.ne.s32.totalorder %s61, %s64
      %p73 = scmp.eq.s32.totalorder %s16, 3
      %p74 = por %p72, %p73
      %p75 = scmp.ne.s32.totalorder %s64, %s65
      %p76 = scmp.eq.s32.totalorder %s16, 0
      %p77 = por %p75, %p76
      %p78 = scmp.ne.s32.totalorder %s64, %s65
      %p79 = scmp.eq.s32.totalorder %s17, 3
      %p80 = por %p78, %p79
      %p82 = scmp.ne.s32.totalorder %s65, %s81
      %p83 = scmp.eq.s32.totalorder %s17, 0
      %p84 = por %p82, %p83
      %p85 = scmp.le.s32.totalorder 1, %s11
      %p86 = scmp.lt.s32.totalorder %s11, 5
      %p87 = pnand %p85, %p86
      %p88 = pneg %p87
      // Predicated region
      $region9: #{tpu_custom_call.1} parent=5 // pred_check
        _
      $region10: #{tpu_custom_call.1} parent=5 // pred_check_branch
        %90 = sbr.rel (%p87) target = $region12
      $region11: #{tpu_custom_call.1} parent=5 // pred_region
        %s91 = ssub.s32 %s11, 1
        // Predicated region
        $region13: #{tpu_custom_call.1} parent=11 // pred_check
          %p92 = pneg %p49
        $region14: #{tpu_custom_call.1} parent=11 // pred_check_branch
          %94 = sbr.rel (%p92) target = $region16
        $region15: #{tpu_custom_call.1} parent=11 // pred_region
          %s96 = ssub.s32 512, 512
          %97 = vsyncadd [#allocation3], %s96
          %s98 = smul.addr %s20, 128
          %s99 = scalar_lea.hbm %s0, %s98
          %s100 = sshll.u32 [#allocation2], 4
          %s101 = int_to_ptr.vmem [resolvable:$true] %s100
          %106 = dma.hbm_to_vmem [thread:$0]  %s99, 512, %s101, [#allocation3], 128, 128, 8
        $region16: #{tpu_custom_call.1} parent=11 // pred_fallthru
          _
      $region12: #{tpu_custom_call.1} parent=5 // pred_fallthru
        _
      %p107 = scmp.lt.s32.totalorder %s11, 4
      // Predicated region
      $region17: #{tpu_custom_call.1} parent=5 // pred_check
        %p108 = pneg %p107
      $region18: #{tpu_custom_call.1} parent=5 // pred_check_branch
        %110 = sbr.rel (%p108) target = $region20
      $region19: #{tpu_custom_call.1} parent=5 // pred_region
        _
      $region20: #{tpu_custom_call.1} parent=5 // pred_fallthru
        _
      %p111 = scmp.le.s32.totalorder 1, %s11
      %p112 = scmp.lt.s32.totalorder %s11, 5
      %p113 = pnand %p111, %p112
      %p114 = pneg %p113
      // Predicated region
      $region21: #{tpu_custom_call.1} parent=5 // pred_check
        _
      $region22: #{tpu_custom_call.1} parent=5 // pred_check_branch
        %116 = sbr.rel (%p113) target = $region24
      $region23: #{tpu_custom_call.1} parent=5 // pred_region
        %s117 = ssub.s32 %s11, 1
        // Predicated region
        $region25: #{tpu_custom_call.1} parent=23 // pred_check
          %p118 = pneg %p49
        $region26: #{tpu_custom_call.1} parent=23 // pred_check_branch
          %120 = sbr.rel (%p118) target = $region28
        $region27: #{tpu_custom_call.1} parent=23 // pred_region
          %121 = dma.done [#allocation3], 512
        $region28: #{tpu_custom_call.1} parent=23 // pred_fallthru
          _
        %p122 = pneg %p49
        %p123 = pneg %p46
        %p124 = pneg %p77
        %p125 = pneg %p74
        %s126 = sand.u32 %s64, 1
        %s127 = scalar_lea.sflag [#allocation4], %s126
        %s128 = sand.u32 %s64, 1
        %s129 = smul.addr %s128, 32
        %s130 = scalar_lea.vmem [#allocation5], %s129
        %s131 = sadd.s32 %s21, %s20
        %s132 = scvt.s32.f32 %s21
        %v133 = vlaneseq
        %v134 = vshrl.u32 %v133, 7
        %v135 = vadd.s32 %v134, 8
        %v136 = vadd.s32 %v134, 16
        %v137 = vadd.s32 %v134, 24
        %vm138 = vcmp.lt.s32.totalorder %v134, 16
        %vm139 = vcmp.lt.s32.totalorder %v135, 16
        %vm140 = vcmp.lt.s32.totalorder %v136, 16
        %vm141 = vcmp.lt.s32.totalorder %v137, 16
        %v142 = vsub.s32 %v134, 16
        %v143 = vsub.s32 %v135, 16
        %v144 = vsub.s32 %v137, 16
        %v145 = vsel %vm138, %v134, %v142
        %v146 = vsel %vm139, %v135, %v143
        %v147 = vsel %vm140, %v136, %v134
        %v148 = vsel %vm141, %v137, %v144
        %v149 = vcvt.s32.f32 %v145
        %v150 = vcvt.s32.f32 %v146
        %v151 = vcvt.s32.f32 %v147
        %v152 = vcvt.s32.f32 %v148
        %v153 = vmul.f32 %v149, -0.5756463
        %v154 = vmul.f32 %v150, -0.5756463
        %v155 = vmul.f32 %v151, -0.5756463
        %v156 = vmul.f32 %v152, -0.5756463
        %v157 = vmul.f32 %v153, 1.442695
        %v158 = vpow.pop %v157
        %v159 = vmul.f32 %v154, 1.442695
        %v160 = vpow.pop %v159
        %v161 = vmul.f32 %v155, 1.442695
        %v162 = vpow.pop %v161
        %v163 = vmul.f32 %v156, 1.442695
        %v164 = vpow.pop %v163
        %v165 = vstv %s132
        %v166 = vmul.f32 %v165, %v158
        %v167 = vmul.f32 %v165, %v160
        %v168 = vmul.f32 %v165, %v162
        %v169 = vmul.f32 %v165, %v164
        %v170 = vand.u32 2147483647, %v166
        %vm171 = vcmp.le.f32.partialorder %v170, 0.7853982
        %vm172 = vcmp.lt.s32.totalorder %v166, 0
        %v173 = vand.u32 %v166, 2139095040
        %v174 = vshrl.u32 %v173, 23
        %v175 = vsub.s32 %v174, 127
        %v176 = vand.u32 2147483647, %v166
        %v177 = vand.u32 %v176, 8388607
        %v178 = vor.u32 %v177, 8388608
        %v179 = vsub.s32 0, %v178
        %v180 = vadd.s32 %v175, 1
        %vm181 = vcmp.gt.s32.totalorder %v180, 0
        %v182 = vsel %vm181, %v180, 0
        %v183 = vshrl.u32 %v182, 5
        %v184 = vand.u32 %v182, 31
        %v185 = vsub.s32 32, %v184
        %v186 = vshrl.u32 683565275, %v185
        %v187 = vshll.u32 683565275, %v184
        %v188 = vshrl.u32 2475754826, %v185
        %v189 = vor.u32 %v187, %v188
        %v190 = vshll.u32 2475754826, %v184
        %v191 = vshrl.u32 2131351028, %v185
        %v192 = vor.u32 %v190, %v191
        %v193 = vshll.u32 2131351028, %v184
        %v194 = vshrl.u32 2102212464, %v185
        %v195 = vor.u32 %v193, %v194
        %v196 = vshll.u32 2102212464, %v184
        %v197 = vshrl.u32 920167782, %v185
        %v198 = vor.u32 %v196, %v197
        %v199 = vshll.u32 920167782, %v184
        %v200 = vshrl.u32 1326507024, %v185
        %v201 = vor.u32 %v199, %v200
        %vm202 = vcmp.lt.s32.totalorder %v183, 1
        %vm203 = vcmp.lt.s32.totalorder %v183, 2
        %vm204 = vcmp.lt.s32.totalorder %v183, 3
        %vm205 = vcmp.lt.s32.totalorder %v183, 4
        %v206 = vsel %vm202, %v186, %v189
        %v207 = vsel %vm205, %v195, 2102212464
        %v208 = vsel %vm204, %v192, %v207
        %v209 = vsel %vm203, %v206, %v208
        %v210 = vsel %vm202, %v189, %v192
        %v211 = vsel %vm205, %v198, 920167782
        %v212 = vsel %vm204, %v195, %v211
        %v213 = vsel %vm203, %v210, %v212
        %v214 = vsel %vm202, %v192, %v195
        %v215 = vsel %vm205, %v201, 1326507024
        %v216 = vsel %vm204, %v198, %v215
        %v217 = vsel %vm203, %v214, %v216
        %v218 = vshll.u32 %v178, 8
        %v219 = vmul.u32.u64.compose %v218, %v217
        %v220 = vextract.low.u32 %v219
        %v221 = vextract.high.u32 %v219
        %v222 = vmul.u32.u64.compose %v218, %v213
        %v223 = vextract.low.u32 %v222
        %v224 = vextract.high.u32 %v222
        %v225 = vmul.u32 %v218, %v209
        %v226 = vadd.s32 %v221, %v223
        %vm227 = vc.u32 %v221, %v223
        %v228 = vadd.s32 %v224, 1
        %v229 = vsel %vm227, %v228, %v224
        %v230 = vadd.s32 %v225, %v229
        %v231 = vadd.s32 %v230, 536870912
        %v232 = vshrl.u32 %v231, 30
        %v233 = vshll.u32 %v232, 30
        %v234 = vsub.s32 %v230, %v233
        %vm235 = vcmp.lt.s32.totalorder %v234, 0
        %v236 = vsub.s32 0, %v234
        %v237 = vsel %vm235, %v236, %v234
        %v238 = vclz %v237
        %v239 = vsub.s32 %v238, 2
        %vm240 = vcmp.gt.s32.totalorder 0, %v239
        %v241 = vsel %vm240, 0, %v239
        %v242 = vsub.s32 32, %v241
        %v243 = vshll.u32 %v234, %v241
        %v244 = vshrl.u32 %v226, %v242
        %v245 = vor.u32 %v243, %v244
        %v246 = vsub.s32 4294967266, %v241
        %v247 = vadd.s32 %v246, 127
        %v248 = vshll.u32 %v247, 23
        %v249 = vor.u32 4788187, %v248
        %v250 = vand.u32 2147483647, %v249
        %v252 = vcvt.s32.f32 %v245
        %v253 = vmul.f32 %v252, %v250
        %v254 = vxor.u32 %v253, 2147483648
        %v255 = vsel %vm172, %v254, %v253
        %v256 = vsub.s32 4, %v232
        %v257 = vsel %vm172, %v256, %v232
        %v258 = vsel %vm171, %v166, %v255
        %v259 = vsel %vm171, 0, %v257
        %v260 = vcosq.f32.pop %v258
        %v261 = vsinq.f32.pop %v258
        %vm262 = vweird.f32 %v166
        %v263 = vadd.s32 %v259, 3
        %v264 = vand.u32 %v263, 3
        %vm265 = vcmp.lt.s32.totalorder %v264, 2
        %vm266 = vcmp.eq.s32.totalorder %v264, 0
        %v267 = vxor.u32 %v261, 2147483648
        %v268 = vsel %vm266, %v260, %v267
        %vm269 = vcmp.eq.s32.totalorder %v264, 2
        %v270 = vxor.u32 %v260, 2147483648
        %v271 = vsel %vm269, %v270, %v261
        %v272 = vsel %vm265, %v268, %v271
        %v273 = vsel %vm262, nan, %v272
        %v274 = vand.u32 2147483647, %v167
        %vm275 = vcmp.le.f32.partialorder %v274, 0.7853982
        %vm276 = vcmp.lt.s32.totalorder %v167, 0
        %v277 = vand.u32 %v167, 2139095040
        %v278 = vshrl.u32 %v277, 23
        %v279 = vsub.s32 %v278, 127
        %v280 = vand.u32 2147483647, %v167
        %v281 = vand.u32 %v280, 8388607
        %v282 = vor.u32 %v281, 8388608
        %v283 = vsub.s32 0, %v282
        %v284 = vadd.s32 %v279, 1
        %vm285 = vcmp.gt.s32.totalorder %v284, 0
        %v286 = vsel %vm285, %v284, 0
        %v287 = vshrl.u32 %v286, 5
        %v288 = vand.u32 %v286, 31
        %v289 = vsub.s32 32, %v288
        %v290 = vshrl.u32 683565275, %v289
        %v291 = vshll.u32 683565275, %v288
        %v292 = vshrl.u32 2475754826, %v289
        %v293 = vor.u32 %v291, %v292
        %v294 = vshll.u32 2475754826, %v288
        %v295 = vshrl.u32 2131351028, %v289
        %v296 = vor.u32 %v294, %v295
        %v297 = vshll.u32 2131351028, %v288
        %v298 = vshrl.u32 2102212464, %v289
        %v299 = vor.u32 %v297, %v298
        %v300 = vshll.u32 2102212464, %v288
        %v301 = vshrl.u32 920167782, %v289
        %v302 = vor.u32 %v300, %v301
        %v303 = vshll.u32 920167782, %v288
        %v304 = vshrl.u32 1326507024, %v289
        %v305 = vor.u32 %v303, %v304
        %vm306 = vcmp.lt.s32.totalorder %v287, 1
        %vm307 = vcmp.lt.s32.totalorder %v287, 2
        %vm308 = vcmp.lt.s32.totalorder %v287, 3
        %vm309 = vcmp.lt.s32.totalorder %v287, 4
        %v310 = vsel %vm306, %v290, %v293
        %v311 = vsel %vm309, %v299, 2102212464
        %v312 = vsel %vm308, %v296, %v311
        %v313 = vsel %vm307, %v310, %v312
        %v314 = vsel %vm306, %v293, %v296
        %v315 = vsel %vm309, %v302, 920167782
        %v316 = vsel %vm308, %v299, %v315
        %v317 = vsel %vm307, %v314, %v316
        %v318 = vsel %vm306, %v296, %v299
        %v319 = vsel %vm309, %v305, 1326507024
        %v320 = vsel %vm308, %v302, %v319
        %v321 = vsel %vm307, %v318, %v320
        %v322 = vshll.u32 %v282, 8
        %v323 = vmul.u32.u64.compose %v322, %v321
        %v324 = vextract.low.u32 %v323
        %v325 = vextract.high.u32 %v323
        %v326 = vmul.u32.u64.compose %v322, %v317
        %v327 = vextract.low.u32 %v326
        %v328 = vextract.high.u32 %v326
        %v329 = vmul.u32 %v322, %v313
        %v330 = vadd.s32 %v325, %v327
        %vm331 = vc.u32 %v325, %v327
        %v332 = vadd.s32 %v328, 1
        %v333 = vsel %vm331, %v332, %v328
        %v334 = vadd.s32 %v329, %v333
        %v335 = vadd.s32 %v334, 536870912
        %v336 = vshrl.u32 %v335, 30
        %v337 = vshll.u32 %v336, 30
        %v338 = vsub.s32 %v334, %v337
        %vm339 = vcmp.lt.s32.totalorder %v338, 0
        %v340 = vsub.s32 0, %v338
        %v341 = vsel %vm339, %v340, %v338
        %v342 = vclz %v341
        %v343 = vsub.s32 %v342, 2
        %vm344 = vcmp.gt.s32.totalorder 0, %v343
        %v345 = vsel %vm344, 0, %v343
        %v346 = vsub.s32 32, %v345
        %v347 = vshll.u32 %v338, %v345
        %v348 = vshrl.u32 %v330, %v346
        %v349 = vor.u32 %v347, %v348
        %v350 = vsub.s32 4294967266, %v345
        %v351 = vadd.s32 %v350, 127
        %v352 = vshll.u32 %v351, 23
        %v353 = vor.u32 4788187, %v352
        %v354 = vand.u32 2147483647, %v353
        %v356 = vcvt.s32.f32 %v349
        %v357 = vmul.f32 %v356, %v354
        %v358 = vxor.u32 %v357, 2147483648
        %v359 = vsel %vm276, %v358, %v357
        %v360 = vsub.s32 4, %v336
        %v361 = vsel %vm276, %v360, %v336
        %v362 = vsel %vm275, %v167, %v359
        %v363 = vsel %vm275, 0, %v361
        %v364 = vcosq.f32.pop %v362
        %v365 = vsinq.f32.pop %v362
        %vm366 = vweird.f32 %v167
        %v367 = vadd.s32 %v363, 3
        %v368 = vand.u32 %v367, 3
        %vm369 = vcmp.lt.s32.totalorder %v368, 2
        %vm370 = vcmp.eq.s32.totalorder %v368, 0
        %v371 = vxor.u32 %v365, 2147483648
        %v372 = vsel %vm370, %v364, %v371
        %vm373 = vcmp.eq.s32.totalorder %v368, 2
        %v374 = vxor.u32 %v364, 2147483648
        %v375 = vsel %vm373, %v374, %v365
        %v376 = vsel %vm369, %v372, %v375
        %v377 = vsel %vm366, nan, %v376
        %v378 = vand.u32 2147483647, %v168
        %vm379 = vcmp.le.f32.partialorder %v378, 0.7853982
        %vm380 = vcmp.lt.s32.totalorder %v168, 0
        %v381 = vand.u32 %v168, 2139095040
        %v382 = vshrl.u32 %v381, 23
        %v383 = vsub.s32 %v382, 127
        %v384 = vand.u32 2147483647, %v168
        %v385 = vand.u32 %v384, 8388607
        %v386 = vor.u32 %v385, 8388608
        %v387 = vsub.s32 0, %v386
        %v388 = vadd.s32 %v383, 1
        %vm389 = vcmp.gt.s32.totalorder %v388, 0
        %v390 = vsel %vm389, %v388, 0
        %v391 = vshrl.u32 %v390, 5
        %v392 = vand.u32 %v390, 31
        %v393 = vsub.s32 32, %v392
        %v394 = vshrl.u32 683565275, %v393
        %v395 = vshll.u32 683565275, %v392
        %v396 = vshrl.u32 2475754826, %v393
        %v397 = vor.u32 %v395, %v396
        %v398 = vshll.u32 2475754826, %v392
        %v399 = vshrl.u32 2131351028, %v393
        %v400 = vor.u32 %v398, %v399
        %v401 = vshll.u32 2131351028, %v392
        %v402 = vshrl.u32 2102212464, %v393
        %v403 = vor.u32 %v401, %v402
        %v404 = vshll.u32 2102212464, %v392
        %v405 = vshrl.u32 920167782, %v393
        %v406 = vor.u32 %v404, %v405
        %v407 = vshll.u32 920167782, %v392
        %v408 = vshrl.u32 1326507024, %v393
        %v409 = vor.u32 %v407, %v408
        %vm410 = vcmp.lt.s32.totalorder %v391, 1
        %vm411 = vcmp.lt.s32.totalorder %v391, 2
        %vm412 = vcmp.lt.s32.totalorder %v391, 3
        %vm413 = vcmp.lt.s32.totalorder %v391, 4
        %v414 = vsel %vm410, %v394, %v397
        %v415 = vsel %vm413, %v403, 2102212464
        %v416 = vsel %vm412, %v400, %v415
        %v417 = vsel %vm411, %v414, %v416
        %v418 = vsel %vm410, %v397, %v400
        %v419 = vsel %vm413, %v406, 920167782
        %v420 = vsel %vm412, %v403, %v419
        %v421 = vsel %vm411, %v418, %v420
        %v422 = vsel %vm410, %v400, %v403
        %v423 = vsel %vm413, %v409, 1326507024
        %v424 = vsel %vm412, %v406, %v423
        %v425 = vsel %vm411, %v422, %v424
        %v426 = vshll.u32 %v386, 8
        %v427 = vmul.u32.u64.compose %v426, %v425
        %v428 = vextract.low.u32 %v427
        %v429 = vextract.high.u32 %v427
        %v430 = vmul.u32.u64.compose %v426, %v421
        %v431 = vextract.low.u32 %v430
        %v432 = vextract.high.u32 %v430
        %v433 = vmul.u32 %v426, %v417
        %v434 = vadd.s32 %v429, %v431
        %vm435 = vc.u32 %v429, %v431
        %v436 = vadd.s32 %v432, 1
        %v437 = vsel %vm435, %v436, %v432
        %v438 = vadd.s32 %v433, %v437
        %v439 = vadd.s32 %v438, 536870912
        %v440 = vshrl.u32 %v439, 30
        %v441 = vshll.u32 %v440, 30
        %v442 = vsub.s32 %v438, %v441
        %vm443 = vcmp.lt.s32.totalorder %v442, 0
        %v444 = vsub.s32 0, %v442
        %v445 = vsel %vm443, %v444, %v442
        %v446 = vclz %v445
        %v447 = vsub.s32 %v446, 2
        %vm448 = vcmp.gt.s32.totalorder 0, %v447
        %v449 = vsel %vm448, 0, %v447
        %v450 = vsub.s32 32, %v449
        %v451 = vshll.u32 %v442, %v449
        %v452 = vshrl.u32 %v434, %v450
        %v453 = vor.u32 %v451, %v452
        %v454 = vsub.s32 4294967266, %v449
        %v455 = vadd.s32 %v454, 127
        %v456 = vshll.u32 %v455, 23
        %v457 = vor.u32 4788187, %v456
        %v458 = vand.u32 2147483647, %v457
        %v460 = vcvt.s32.f32 %v453
        %v461 = vmul.f32 %v460, %v458
        %v462 = vxor.u32 %v461, 2147483648
        %v463 = vsel %vm380, %v462, %v461
        %v464 = vsub.s32 4, %v440
        %v465 = vsel %vm380, %v464, %v440
        %v466 = vsel %vm379, %v168, %v463
        %v467 = vsel %vm379, 0, %v465
        %v468 = vcosq.f32.pop %v466
        %v469 = vsinq.f32.pop %v466
        %vm470 = vweird.f32 %v168
        %v471 = vadd.s32 %v467, 3
        %v472 = vand.u32 %v471, 3
        %vm473 = vcmp.lt.s32.totalorder %v472, 2
        %vm474 = vcmp.eq.s32.totalorder %v472, 0
        %v475 = vxor.u32 %v469, 2147483648
        %v476 = vsel %vm474, %v468, %v475
        %vm477 = vcmp.eq.s32.totalorder %v472, 2
        %v478 = vxor.u32 %v468, 2147483648
        %v479 = vsel %vm477, %v478, %v469
        %v480 = vsel %vm473, %v476, %v479
        %v481 = vsel %vm470, nan, %v480
        %v482 = vand.u32 2147483647, %v169
        %vm483 = vcmp.le.f32.partialorder %v482, 0.7853982
        %vm484 = vcmp.lt.s32.totalorder %v169, 0
        %v485 = vand.u32 %v169, 2139095040
        %v486 = vshrl.u32 %v485, 23
        %v487 = vsub.s32 %v486, 127
        %v488 = vand.u32 2147483647, %v169
        %v489 = vand.u32 %v488, 8388607
        %v490 = vor.u32 %v489, 8388608
        %v491 = vsub.s32 0, %v490
        %v492 = vadd.s32 %v487, 1
        %vm493 = vcmp.gt.s32.totalorder %v492, 0
        %v494 = vsel %vm493, %v492, 0
        %v495 = vshrl.u32 %v494, 5
        %v496 = vand.u32 %v494, 31
        %v497 = vsub.s32 32, %v496
        %v498 = vshrl.u32 683565275, %v497
        %v499 = vshll.u32 683565275, %v496
        %v500 = vshrl.u32 2475754826, %v497
        %v501 = vor.u32 %v499, %v500
        %v502 = vshll.u32 2475754826, %v496
        %v503 = vshrl.u32 2131351028, %v497
        %v504 = vor.u32 %v502, %v503
        %v505 = vshll.u32 2131351028, %v496
        %v506 = vshrl.u32 2102212464, %v497
        %v507 = vor.u32 %v505, %v506
        %v508 = vshll.u32 2102212464, %v496
        %v509 = vshrl.u32 920167782, %v497
        %v510 = vor.u32 %v508, %v509
        %v511 = vshll.u32 920167782, %v496
        %v512 = vshrl.u32 1326507024, %v497
        %v513 = vor.u32 %v511, %v512
        %vm514 = vcmp.lt.s32.totalorder %v495, 1
        %vm515 = vcmp.lt.s32.totalorder %v495, 2
        %vm516 = vcmp.lt.s32.totalorder %v495, 3
        %vm517 = vcmp.lt.s32.totalorder %v495, 4
        %v518 = vsel %vm514, %v498, %v501
        %v519 = vsel %vm517, %v507, 2102212464
        %v520 = vsel %vm516, %v504, %v519
        %v521 = vsel %vm515, %v518, %v520
        %v522 = vsel %vm514, %v501, %v504
        %v523 = vsel %vm517, %v510, 920167782
        %v524 = vsel %vm516, %v507, %v523
        %v525 = vsel %vm515, %v522, %v524
        %v526 = vsel %vm514, %v504, %v507
        %v527 = vsel %vm517, %v513, 1326507024
        %v528 = vsel %vm516, %v510, %v527
        %v529 = vsel %vm515, %v526, %v528
        %v530 = vshll.u32 %v490, 8
        %v531 = vmul.u32.u64.compose %v530, %v529
        %v532 = vextract.low.u32 %v531
        %v533 = vextract.high.u32 %v531
        %v534 = vmul.u32.u64.compose %v530, %v525
        %v535 = vextract.low.u32 %v534
        %v536 = vextract.high.u32 %v534
        %v537 = vmul.u32 %v530, %v521
        %v538 = vadd.s32 %v533, %v535
        %vm539 = vc.u32 %v533, %v535
        %v540 = vadd.s32 %v536, 1
        %v541 = vsel %vm539, %v540, %v536
        %v542 = vadd.s32 %v537, %v541
        %v543 = vadd.s32 %v542, 536870912
        %v544 = vshrl.u32 %v543, 30
        %v545 = vshll.u32 %v544, 30
        %v546 = vsub.s32 %v542, %v545
        %vm547 = vcmp.lt.s32.totalorder %v546, 0
        %v548 = vsub.s32 0, %v546
        %v549 = vsel %vm547, %v548, %v546
        %v550 = vclz %v549
        %v551 = vsub.s32 %v550, 2
        %vm552 = vcmp.gt.s32.totalorder 0, %v551
        %v553 = vsel %vm552, 0, %v551
        %v554 = vsub.s32 32, %v553
        %v555 = vshll.u32 %v546, %v553
        %v556 = vshrl.u32 %v538, %v554
        %v557 = vor.u32 %v555, %v556
        %v558 = vsub.s32 4294967266, %v553
        %v559 = vadd.s32 %v558, 127
        %v560 = vshll.u32 %v559, 23
        %v561 = vor.u32 4788187, %v560
        %v562 = vand.u32 2147483647, %v561
        %v564 = vcvt.s32.f32 %v557
        %v565 = vmul.f32 %v564, %v562
        %v566 = vxor.u32 %v565, 2147483648
        %v567 = vsel %vm484, %v566, %v565
        %v568 = vsub.s32 4, %v544
        %v569 = vsel %vm484, %v568, %v544
        %v570 = vsel %vm483, %v169, %v567
        %v571 = vsel %vm483, 0, %v569
        %v572 = vcosq.f32.pop %v570
        %v573 = vsinq.f32.pop %v570
        %vm574 = vweird.f32 %v169
        %v575 = vadd.s32 %v571, 3
        %v576 = vand.u32 %v575, 3
        %vm577 = vcmp.lt.s32.totalorder %v576, 2
        %vm578 = vcmp.eq.s32.totalorder %v576, 0
        %v579 = vxor.u32 %v573, 2147483648
        %v580 = vsel %vm578, %v572, %v579
        %vm581 = vcmp.eq.s32.totalorder %v576, 2
        %v582 = vxor.u32 %v572, 2147483648
        %v583 = vsel %vm581, %v582, %v573
        %v584 = vsel %vm577, %v580, %v583
        %v585 = vsel %vm574, nan, %v584
        %v586 = vand.u32 2147483647, %v166
        %vm587 = vcmp.le.f32.partialorder %v586, 0.7853982
        %vm588 = vcmp.lt.s32.totalorder %v166, 0
        %v589 = vand.u32 %v166, 2139095040
        %v590 = vshrl.u32 %v589, 23
        %v591 = vsub.s32 %v590, 127
        %v592 = vand.u32 2147483647, %v166
        %v593 = vand.u32 %v592, 8388607
        %v594 = vor.u32 %v593, 8388608
        %v595 = vsub.s32 0, %v594
        %v596 = vadd.s32 %v591, 1
        %vm597 = vcmp.gt.s32.totalorder %v596, 0
        %v598 = vsel %vm597, %v596, 0
        %v599 = vshrl.u32 %v598, 5
        %v600 = vand.u32 %v598, 31
        %v601 = vsub.s32 32, %v600
        %v602 = vshrl.u32 683565275, %v601
        %v603 = vshll.u32 683565275, %v600
        %v604 = vshrl.u32 2475754826, %v601
        %v605 = vor.u32 %v603, %v604
        %v606 = vshll.u32 2475754826, %v600
        %v607 = vshrl.u32 2131351028, %v601
        %v608 = vor.u32 %v606, %v607
        %v609 = vshll.u32 2131351028, %v600
        %v610 = vshrl.u32 2102212464, %v601
        %v611 = vor.u32 %v609, %v610
        %v612 = vshll.u32 2102212464, %v600
        %v613 = vshrl.u32 920167782, %v601
        %v614 = vor.u32 %v612, %v613
        %v615 = vshll.u32 920167782, %v600
        %v616 = vshrl.u32 1326507024, %v601
        %v617 = vor.u32 %v615, %v616
        %vm618 = vcmp.lt.s32.totalorder %v599, 1
        %vm619 = vcmp.lt.s32.totalorder %v599, 2
        %vm620 = vcmp.lt.s32.totalorder %v599, 3
        %vm621 = vcmp.lt.s32.totalorder %v599, 4
        %v622 = vsel %vm618, %v602, %v605
        %v623 = vsel %vm621, %v611, 2102212464
        %v624 = vsel %vm620, %v608, %v623
        %v625 = vsel %vm619, %v622, %v624
        %v626 = vsel %vm618, %v605, %v608
        %v627 = vsel %vm621, %v614, 920167782
        %v628 = vsel %vm620, %v611, %v627
        %v629 = vsel %vm619, %v626, %v628
        %v630 = vsel %vm618, %v608, %v611
        %v631 = vsel %vm621, %v617, 1326507024
        %v632 = vsel %vm620, %v614, %v631
        %v633 = vsel %vm619, %v630, %v632
        %v634 = vshll.u32 %v594, 8
        %v635 = vmul.u32.u64.compose %v634, %v633
        %v636 = vextract.low.u32 %v635
        %v637 = vextract.high.u32 %v635
        %v638 = vmul.u32.u64.compose %v634, %v629
        %v639 = vextract.low.u32 %v638
        %v640 = vextract.high.u32 %v638
        %v641 = vmul.u32 %v634, %v625
        %v642 = vadd.s32 %v637, %v639
        %vm643 = vc.u32 %v637, %v639
        %v644 = vadd.s32 %v640, 1
        %v645 = vsel %vm643, %v644, %v640
        %v646 = vadd.s32 %v641, %v645
        %v647 = vadd.s32 %v646, 536870912
        %v648 = vshrl.u32 %v647, 30
        %v649 = vshll.u32 %v648, 30
        %v650 = vsub.s32 %v646, %v649
        %vm651 = vcmp.lt.s32.totalorder %v650, 0
        %v652 = vsub.s32 0, %v650
        %v653 = vsel %vm651, %v652, %v650
        %v654 = vclz %v653
        %v655 = vsub.s32 %v654, 2
        %vm656 = vcmp.gt.s32.totalorder 0, %v655
        %v657 = vsel %vm656, 0, %v655
        %v658 = vsub.s32 32, %v657
        %v659 = vshll.u32 %v650, %v657
        %v660 = vshrl.u32 %v642, %v658
        %v661 = vor.u32 %v659, %v660
        %v662 = vsub.s32 4294967266, %v657
        %v663 = vadd.s32 %v662, 127
        %v664 = vshll.u32 %v663, 23
        %v665 = vor.u32 4788187, %v664
        %v666 = vand.u32 2147483647, %v665
        %v668 = vcvt.s32.f32 %v661
        %v669 = vmul.f32 %v668, %v666
        %v670 = vxor.u32 %v669, 2147483648
        %v671 = vsel %vm588, %v670, %v669
        %v672 = vsub.s32 4, %v648
        %v673 = vsel %vm588, %v672, %v648
        %v674 = vsel %vm587, %v166, %v671
        %v675 = vsel %vm587, 0, %v673
        %v676 = vcosq.f32.pop %v674
        %v677 = vsinq.f32.pop %v674
        %vm678 = vweird.f32 %v166
        %v679 = vand.u32 %v675, 3
        %vm680 = vcmp.lt.s32.totalorder %v679, 2
        %vm681 = vcmp.eq.s32.totalorder %v679, 0
        %v682 = vxor.u32 %v677, 2147483648
        %v683 = vsel %vm681, %v676, %v682
        %vm684 = vcmp.eq.s32.totalorder %v679, 2
        %v685 = vxor.u32 %v676, 2147483648
        %v686 = vsel %vm684, %v685, %v677
        %v687 = vsel %vm680, %v683, %v686
        %v688 = vsel %vm678, nan, %v687
        %v689 = vand.u32 2147483647, %v167
        %vm690 = vcmp.le.f32.partialorder %v689, 0.7853982
        %vm691 = vcmp.lt.s32.totalorder %v167, 0
        %v692 = vand.u32 %v167, 2139095040
        %v693 = vshrl.u32 %v692, 23
        %v694 = vsub.s32 %v693, 127
        %v695 = vand.u32 2147483647, %v167
        %v696 = vand.u32 %v695, 8388607
        %v697 = vor.u32 %v696, 8388608
        %v698 = vsub.s32 0, %v697
        %v699 = vadd.s32 %v694, 1
        %vm700 = vcmp.gt.s32.totalorder %v699, 0
        %v701 = vsel %vm700, %v699, 0
        %v702 = vshrl.u32 %v701, 5
        %v703 = vand.u32 %v701, 31
        %v704 = vsub.s32 32, %v703
        %v705 = vshrl.u32 683565275, %v704
        %v706 = vshll.u32 683565275, %v703
        %v707 = vshrl.u32 2475754826, %v704
        %v708 = vor.u32 %v706, %v707
        %v709 = vshll.u32 2475754826, %v703
        %v710 = vshrl.u32 2131351028, %v704
        %v711 = vor.u32 %v709, %v710
        %v712 = vshll.u32 2131351028, %v703
        %v713 = vshrl.u32 2102212464, %v704
        %v714 = vor.u32 %v712, %v713
        %v715 = vshll.u32 2102212464, %v703
        %v716 = vshrl.u32 920167782, %v704
        %v717 = vor.u32 %v715, %v716
        %v718 = vshll.u32 920167782, %v703
        %v719 = vshrl.u32 1326507024, %v704
        %v720 = vor.u32 %v718, %v719
        %vm721 = vcmp.lt.s32.totalorder %v702, 1
        %vm722 = vcmp.lt.s32.totalorder %v702, 2
        %vm723 = vcmp.lt.s32.totalorder %v702, 3
        %vm724 = vcmp.lt.s32.totalorder %v702, 4
        %v725 = vsel %vm721, %v705, %v708
        %v726 = vsel %vm724, %v714, 2102212464
        %v727 = vsel %vm723, %v711, %v726
        %v728 = vsel %vm722, %v725, %v727
        %v729 = vsel %vm721, %v708, %v711
        %v730 = vsel %vm724, %v717, 920167782
        %v731 = vsel %vm723, %v714, %v730
        %v732 = vsel %vm722, %v729, %v731
        %v733 = vsel %vm721, %v711, %v714
        %v734 = vsel %vm724, %v720, 1326507024
        %v735 = vsel %vm723, %v717, %v734
        %v736 = vsel %vm722, %v733, %v735
        %v737 = vshll.u32 %v697, 8
        %v738 = vmul.u32.u64.compose %v737, %v736
        %v739 = vextract.low.u32 %v738
        %v740 = vextract.high.u32 %v738
        %v741 = vmul.u32.u64.compose %v737, %v732
        %v742 = vextract.low.u32 %v741
        %v743 = vextract.high.u32 %v741
        %v744 = vmul.u32 %v737, %v728
        %v745 = vadd.s32 %v740, %v742
        %vm746 = vc.u32 %v740, %v742
        %v747 = vadd.s32 %v743, 1
        %v748 = vsel %vm746, %v747, %v743
        %v749 = vadd.s32 %v744, %v748
        %v750 = vadd.s32 %v749, 536870912
        %v751 = vshrl.u32 %v750, 30
        %v752 = vshll.u32 %v751, 30
        %v753 = vsub.s32 %v749, %v752
        %vm754 = vcmp.lt.s32.totalorder %v753, 0
        %v755 = vsub.s32 0, %v753
        %v756 = vsel %vm754, %v755, %v753
        %v757 = vclz %v756
        %v758 = vsub.s32 %v757, 2
        %vm759 = vcmp.gt.s32.totalorder 0, %v758
        %v760 = vsel %vm759, 0, %v758
        %v761 = vsub.s32 32, %v760
        %v762 = vshll.u32 %v753, %v760
        %v763 = vshrl.u32 %v745, %v761
        %v764 = vor.u32 %v762, %v763
        %v765 = vsub.s32 4294967266, %v760
        %v766 = vadd.s32 %v765, 127
        %v767 = vshll.u32 %v766, 23
        %v768 = vor.u32 4788187, %v767
        %v769 = vand.u32 2147483647, %v768
        %v771 = vcvt.s32.f32 %v764
        %v772 = vmul.f32 %v771, %v769
        %v773 = vxor.u32 %v772, 2147483648
        %v774 = vsel %vm691, %v773, %v772
        %v775 = vsub.s32 4, %v751
        %v776 = vsel %vm691, %v775, %v751
        %v777 = vsel %vm690, %v167, %v774
        %v778 = vsel %vm690, 0, %v776
        %v779 = vcosq.f32.pop %v777
        %v780 = vsinq.f32.pop %v777
        %vm781 = vweird.f32 %v167
        %v782 = vand.u32 %v778, 3
        %vm783 = vcmp.lt.s32.totalorder %v782, 2
        %vm784 = vcmp.eq.s32.totalorder %v782, 0
        %v785 = vxor.u32 %v780, 2147483648
        %v786 = vsel %vm784, %v779, %v785
        %vm787 = vcmp.eq.s32.totalorder %v782, 2
        %v788 = vxor.u32 %v779, 2147483648
        %v789 = vsel %vm787, %v788, %v780
        %v790 = vsel %vm783, %v786, %v789
        %v791 = vsel %vm781, nan, %v790
        %v792 = vand.u32 2147483647, %v168
        %vm793 = vcmp.le.f32.partialorder %v792, 0.7853982
        %vm794 = vcmp.lt.s32.totalorder %v168, 0
        %v795 = vand.u32 %v168, 2139095040
        %v796 = vshrl.u32 %v795, 23
        %v797 = vsub.s32 %v796, 127
        %v798 = vand.u32 2147483647, %v168
        %v799 = vand.u32 %v798, 8388607
        %v800 = vor.u32 %v799, 8388608
        %v801 = vsub.s32 0, %v800
        %v802 = vadd.s32 %v797, 1
        %vm803 = vcmp.gt.s32.totalorder %v802, 0
        %v804 = vsel %vm803, %v802, 0
        %v805 = vshrl.u32 %v804, 5
        %v806 = vand.u32 %v804, 31
        %v807 = vsub.s32 32, %v806
        %v808 = vshrl.u32 683565275, %v807
        %v809 = vshll.u32 683565275, %v806
        %v810 = vshrl.u32 2475754826, %v807
        %v811 = vor.u32 %v809, %v810
        %v812 = vshll.u32 2475754826, %v806
        %v813 = vshrl.u32 2131351028, %v807
        %v814 = vor.u32 %v812, %v813
        %v815 = vshll.u32 2131351028, %v806
        %v816 = vshrl.u32 2102212464, %v807
        %v817 = vor.u32 %v815, %v816
        %v818 = vshll.u32 2102212464, %v806
        %v819 = vshrl.u32 920167782, %v807
        %v820 = vor.u32 %v818, %v819
        %v821 = vshll.u32 920167782, %v806
        %v822 = vshrl.u32 1326507024, %v807
        %v823 = vor.u32 %v821, %v822
        %vm824 = vcmp.lt.s32.totalorder %v805, 1
        %vm825 = vcmp.lt.s32.totalorder %v805, 2
        %vm826 = vcmp.lt.s32.totalorder %v805, 3
        %vm827 = vcmp.lt.s32.totalorder %v805, 4
        %v828 = vsel %vm824, %v808, %v811
        %v829 = vsel %vm827, %v817, 2102212464
        %v830 = vsel %vm826, %v814, %v829
        %v831 = vsel %vm825, %v828, %v830
        %v832 = vsel %vm824, %v811, %v814
        %v833 = vsel %vm827, %v820, 920167782
        %v834 = vsel %vm826, %v817, %v833
        %v835 = vsel %vm825, %v832, %v834
        %v836 = vsel %vm824, %v814, %v817
        %v837 = vsel %vm827, %v823, 1326507024
        %v838 = vsel %vm826, %v820, %v837
        %v839 = vsel %vm825, %v836, %v838
        %v840 = vshll.u32 %v800, 8
        %v841 = vmul.u32.u64.compose %v840, %v839
        %v842 = vextract.low.u32 %v841
        %v843 = vextract.high.u32 %v841
        %v844 = vmul.u32.u64.compose %v840, %v835
        %v845 = vextract.low.u32 %v844
        %v846 = vextract.high.u32 %v844
        %v847 = vmul.u32 %v840, %v831
        %v848 = vadd.s32 %v843, %v845
        %vm849 = vc.u32 %v843, %v845
        %v850 = vadd.s32 %v846, 1
        %v851 = vsel %vm849, %v850, %v846
        %v852 = vadd.s32 %v847, %v851
        %v853 = vadd.s32 %v852, 536870912
        %v854 = vshrl.u32 %v853, 30
        %v855 = vshll.u32 %v854, 30
        %v856 = vsub.s32 %v852, %v855
        %vm857 = vcmp.lt.s32.totalorder %v856, 0
        %v858 = vsub.s32 0, %v856
        %v859 = vsel %vm857, %v858, %v856
        %v860 = vclz %v859
        %v861 = vsub.s32 %v860, 2
        %vm862 = vcmp.gt.s32.totalorder 0, %v861
        %v863 = vsel %vm862, 0, %v861
        %v864 = vsub.s32 32, %v863
        %v865 = vshll.u32 %v856, %v863
        %v866 = vshrl.u32 %v848, %v864
        %v867 = vor.u32 %v865, %v866
        %v868 = vsub.s32 4294967266, %v863
        %v869 = vadd.s32 %v868, 127
        %v870 = vshll.u32 %v869, 23
        %v871 = vor.u32 4788187, %v870
        %v872 = vand.u32 2147483647, %v871
        %v874 = vcvt.s32.f32 %v867
        %v875 = vmul.f32 %v874, %v872
        %v876 = vxor.u32 %v875, 2147483648
        %v877 = vsel %vm794, %v876, %v875
        %v878 = vsub.s32 4, %v854
        %v879 = vsel %vm794, %v878, %v854
        %v880 = vsel %vm793, %v168, %v877
        %v881 = vsel %vm793, 0, %v879
        %v882 = vcosq.f32.pop %v880
        %v883 = vsinq.f32.pop %v880
        %vm884 = vweird.f32 %v168
        %v885 = vand.u32 %v881, 3
        %vm886 = vcmp.lt.s32.totalorder %v885, 2
        %vm887 = vcmp.eq.s32.totalorder %v885, 0
        %v888 = vxor.u32 %v883, 2147483648
        %v889 = vsel %vm887, %v882, %v888
        %vm890 = vcmp.eq.s32.totalorder %v885, 2
        %v891 = vxor.u32 %v882, 2147483648
        %v892 = vsel %vm890, %v891, %v883
        %v893 = vsel %vm886, %v889, %v892
        %v894 = vsel %vm884, nan, %v893
        %v895 = vand.u32 2147483647, %v169
        %vm896 = vcmp.le.f32.partialorder %v895, 0.7853982
        %vm897 = vcmp.lt.s32.totalorder %v169, 0
        %v898 = vand.u32 %v169, 2139095040
        %v899 = vshrl.u32 %v898, 23
        %v900 = vsub.s32 %v899, 127
        %v901 = vand.u32 2147483647, %v169
        %v902 = vand.u32 %v901, 8388607
        %v903 = vor.u32 %v902, 8388608
        %v904 = vsub.s32 0, %v903
        %v905 = vadd.s32 %v900, 1
        %vm906 = vcmp.gt.s32.totalorder %v905, 0
        %v907 = vsel %vm906, %v905, 0
        %v908 = vshrl.u32 %v907, 5
        %v909 = vand.u32 %v907, 31
        %v910 = vsub.s32 32, %v909
        %v911 = vshrl.u32 683565275, %v910
        %v912 = vshll.u32 683565275, %v909
        %v913 = vshrl.u32 2475754826, %v910
        %v914 = vor.u32 %v912, %v913
        %v915 = vshll.u32 2475754826, %v909
        %v916 = vshrl.u32 2131351028, %v910
        %v917 = vor.u32 %v915, %v916
        %v918 = vshll.u32 2131351028, %v909
        %v919 = vshrl.u32 2102212464, %v910
        %v920 = vor.u32 %v918, %v919
        %v921 = vshll.u32 2102212464, %v909
        %v922 = vshrl.u32 920167782, %v910
        %v923 = vor.u32 %v921, %v922
        %v924 = vshll.u32 920167782, %v909
        %v925 = vshrl.u32 1326507024, %v910
        %v926 = vor.u32 %v924, %v925
        %vm927 = vcmp.lt.s32.totalorder %v908, 1
        %vm928 = vcmp.lt.s32.totalorder %v908, 2
        %vm929 = vcmp.lt.s32.totalorder %v908, 3
        %vm930 = vcmp.lt.s32.totalorder %v908, 4
        %v931 = vsel %vm927, %v911, %v914
        %v932 = vsel %vm930, %v920, 2102212464
        %v933 = vsel %vm929, %v917, %v932
        %v934 = vsel %vm928, %v931, %v933
        %v935 = vsel %vm927, %v914, %v917
        %v936 = vsel %vm930, %v923, 920167782
        %v937 = vsel %vm929, %v920, %v936
        %v938 = vsel %vm928, %v935, %v937
        %v939 = vsel %vm927, %v917, %v920
        %v940 = vsel %vm930, %v926, 1326507024
        %v941 = vsel %vm929, %v923, %v940
        %v942 = vsel %vm928, %v939, %v941
        %v943 = vshll.u32 %v903, 8
        %v944 = vmul.u32.u64.compose %v943, %v942
        %v945 = vextract.low.u32 %v944
        %v946 = vextract.high.u32 %v944
        %v947 = vmul.u32.u64.compose %v943, %v938
        %v948 = vextract.low.u32 %v947
        %v949 = vextract.high.u32 %v947
        %v950 = vmul.u32 %v943, %v934
        %v951 = vadd.s32 %v946, %v948
        %vm952 = vc.u32 %v946, %v948
        %v953 = vadd.s32 %v949, 1
        %v954 = vsel %vm952, %v953, %v949
        %v955 = vadd.s32 %v950, %v954
        %v956 = vadd.s32 %v955, 536870912
        %v957 = vshrl.u32 %v956, 30
        %v958 = vshll.u32 %v957, 30
        %v959 = vsub.s32 %v955, %v958
        %vm960 = vcmp.lt.s32.totalorder %v959, 0
        %v961 = vsub.s32 0, %v959
        %v962 = vsel %vm960, %v961, %v959
        %v963 = vclz %v962
        %v964 = vsub.s32 %v963, 2
        %vm965 = vcmp.gt.s32.totalorder 0, %v964
        %v966 = vsel %vm965, 0, %v964
        %v967 = vsub.s32 32, %v966
        %v968 = vshll.u32 %v959, %v966
        %v969 = vshrl.u32 %v951, %v967
        %v970 = vor.u32 %v968, %v969
        %v971 = vsub.s32 4294967266, %v966
        %v972 = vadd.s32 %v971, 127
        %v973 = vshll.u32 %v972, 23
        %v974 = vor.u32 4788187, %v973
        %v975 = vand.u32 2147483647, %v974
        %v977 = vcvt.s32.f32 %v970
        %v978 = vmul.f32 %v977, %v975
        %v979 = vxor.u32 %v978, 2147483648
        %v980 = vsel %vm897, %v979, %v978
        %v981 = vsub.s32 4, %v957
        %v982 = vsel %vm897, %v981, %v957
        %v983 = vsel %vm896, %v169, %v980
        %v984 = vsel %vm896, 0, %v982
        %v985 = vcosq.f32.pop %v983
        %v986 = vsinq.f32.pop %v983
        %vm987 = vweird.f32 %v169
        %v988 = vand.u32 %v984, 3
        %vm989 = vcmp.lt.s32.totalorder %v988, 2
        %vm990 = vcmp.eq.s32.totalorder %v988, 0
        %v991 = vxor.u32 %v986, 2147483648
        %v992 = vsel %vm990, %v985, %v991
        %vm993 = vcmp.eq.s32.totalorder %v988, 2
        %v994 = vxor.u32 %v985, 2147483648
        %v995 = vsel %vm993, %v994, %v986
        %v996 = vsel %vm989, %v992, %v995
        %v997 = vsel %vm987, nan, %v996
        %v998 = vsel %vm138, %v273, %v688
        %v999 = vsel %vm139, %v377, %v791
        %v1000 = vsel %vm140, %v481, %v894
        %v1001 = vsel %vm141, %v585, %v997
        %v1002 = vld [vmem:[#allocation2] sm:$0xff]
        %v1003 = vld [vmem:[#allocation2 + $0x8] sm:$0xff]
        %v1004 = vld [vmem:[#allocation2 + $0x10] sm:$0xff]
        %v1005 = vld [vmem:[#allocation2 + $0x18] sm:$0xff]
        %v1006 = vadd.f32 %v998, %v1002
        %v1007 = vadd.f32 %v999, %v1003
        %v1008 = vadd.f32 %v1000, %v1004
        %v1009 = vadd.f32 %v1001, %v1005
        %v1010 = vmul.f32 %v1006, 0.33333334
        %v1011 = vmul.f32 %v1007, 0.33333334
        %v1012 = vmul.f32 %v1008, 0.33333334
        %v1013 = vmul.f32 %v1009, 0.33333334
        %1014 = vst [vmem:[%s130] sm:$0xff] %v1010
        %1015 = vst [vmem:[%s130 + $0x8] sm:$0xff] %v1011
        %1016 = vst [vmem:[%s130 + $0x10] sm:$0xff] %v1012
        %1017 = vst [vmem:[%s130 + $0x18] sm:$0xff] %v1013
        %s1018 = sand.u32 %s64, 1
        %s1019 = scalar_lea.sflag [#allocation4], %s1018
        %s1020 = sand.u32 %s64, 1
        %s1021 = smul.addr %s1020, 32
        %s1022 = scalar_lea.vmem [#allocation5], %s1021
        // Predicated region
        $region29: #{tpu_custom_call.1} parent=23 // pred_check
          %p1023 = pneg %p74
        $region30: #{tpu_custom_call.1} parent=23 // pred_check_branch
          %1025 = sbr.rel (%p1023) target = $region32
        $region31: #{tpu_custom_call.1} parent=23 // pred_region
          %s1026 = sadd.s32 %s21, %s20
          %s1028 = ssub.s32 512, 512
          %1029 = vsyncadd %s1019, %s1028
          %s1030 = smul.addr %s1026, 128
          %s1031 = scalar_lea.hbm %s1, %s1030
          %s1032 = sshll.u32 %s1022, 4
          %s1033 = int_to_ptr.vmem [resolvable:$true] %s1032
          %1038 = dma.vmem_to_hbm [thread:$0]  %s1033, 512, %s1031, %s1019, 128, 512, 8
        $region32: #{tpu_custom_call.1} parent=23 // pred_fallthru
          _
      $region24: #{tpu_custom_call.1} parent=5 // pred_fallthru
        _
      %p1039 = scmp.le.s32.totalorder 2, %s11
      // Predicated region
      $region33: #{tpu_custom_call.1} parent=5 // pred_check
        %p1040 = pneg %p1039
      $region34: #{tpu_custom_call.1} parent=5 // pred_check_branch
        %1042 = sbr.rel (%p1040) target = $region36
      $region35: #{tpu_custom_call.1} parent=5 // pred_region
        %s1043 = ssub.s32 %s11, 2
        // Predicated region
        $region37: #{tpu_custom_call.1} parent=35 // pred_check
          %p1044 = pneg %p80
        $region38: #{tpu_custom_call.1} parent=35 // pred_check_branch
          %1046 = sbr.rel (%p1044) target = $region40
        $region39: #{tpu_custom_call.1} parent=35 // pred_region
          %s1047 = sand.u32 %s65, 1
          %s1048 = scalar_lea.sflag [#allocation4], %s1047
          %s1049 = sand.u32 %s65, 1
          %s1050 = smul.addr %s1049, 32
          %s1051 = scalar_lea.vmem [#allocation5], %s1050
          %1052 = dma.done %s1048, 512
        $region40: #{tpu_custom_call.1} parent=35 // pred_fallthru
          _
      $region36: #{tpu_custom_call.1} parent=5 // pred_fallthru
        _
    $region6: #{tpu_custom_call.1} parent=1 // loop_footer
      %s15 = sadd.s32 1, %s11
    $region7: #{tpu_custom_call.1} parent=1 // loop_footer_branch
      %10 = sbr.rel target = $region3
    $region8: #{tpu_custom_call.1} parent=1 // loop_exit
      _
    %1053 = vsyncpa [#allocation3], 1
    %s1054 = scalar_lea.sflag [#allocation3], 1
    %1055 = vsyncpa %s1054, 1
    %1056 = vsyncpa [#allocation4], 1
    %s1057 = scalar_lea.sflag [#allocation4], 1
    %1058 = vsyncpa %s1057, 1

</llo_original>
